<compile_context>
chip_gen: v5e
topology: v5e:2x2
jax: 0.10.0
libtpu: 0.0.40
codegen_flags: <defaults>
</compile_context>

<pallas_src>
import jax
import jax.numpy as jnp
from jax import lax
from jax.experimental import pallas as pl
from jax.experimental.pallas import tpu as pltpu


# ----------------------------- tiling helpers ------------------------------ #

def _pick_rows(R, row_bytes, target_bytes=1 << 21):
    """Largest row tile that divides R, is a multiple of 8 and fits target_bytes."""
    max_rows = max(8, target_bytes // max(int(row_bytes), 1))
    best = None
    t = 8
    limit = min(R, max_rows)
    while t <= limit:
        if R % t == 0:
            best = t
        t += 8
    return best if best is not None else R   # full-extent fallback is always legal


def _lane_dense_view(x2d):
    """View an (M, C) channels-last slab as a lane-dense (R, 128) slab if possible."""
    M, C = x2d.shape
    if C < 128 and 128 % C == 0 and (M * C) % 128 == 0:
        return x2d.reshape((M * C) // 128, 128), 128 // C
    return x2d, 1


# ------------------------------- kernels ----------------------------------- #

def _stats_kernel(x_ref, sum_ref, sq_ref):
    """Fused per-lane sum and sum-of-squares over the row axis (single pass)."""
    i = pl.program_id(0)

    @pl.when(i == 0)
    def _():
        sum_ref[...] = jnp.zeros_like(sum_ref)
        sq_ref[...] = jnp.zeros_like(sq_ref)

    xf = x_ref[...].astype(jnp.float32)
    sum_ref[...] += jnp.sum(xf, axis=0, keepdims=True)
    sq_ref[...] += jnp.sum(xf * xf, axis=0, keepdims=True)


def _affine_swish_kernel(x_ref, scale_ref, shift_ref, y_ref):
    """y = swish(x * scale + shift), scale/shift broadcast from a (1, L) row."""
    z = x_ref[...].astype(jnp.float32) * scale_ref[...] + shift_ref[...]
    y_ref[...] = (z * (1.0 / (1.0 + jnp.exp(-z)))).astype(y_ref.dtype)


def _matmul_bias_kernel(a_ref, w_ref, b_ref, o_ref):
    """o = a @ w + b (fp32 accumulation on the MXU)."""
    acc = jnp.dot(a_ref[...], w_ref[...], preferred_element_type=jnp.float32)
    o_ref[...] = (acc + b_ref[...]).astype(o_ref.dtype)


def _make_pool_kernel(inv_psp):
    def kernel(x_ref, o_ref):
        j = pl.program_id(1)

        @pl.when(j == 0)
        def _():
            o_ref[...] = jnp.zeros_like(o_ref)

        o_ref[...] += jnp.sum(x_ref[...].astype(jnp.float32), axis=1, keepdims=True)

        @pl.when(j == pl.num_programs(1) - 1)
        def _():
            o_ref[...] *= inv_psp
    return kernel


def _se_mlp_kernel(p_ref, w1_ref, b1_ref, w2_ref, b2_ref, o_ref):
    """gate = sigmoid(fc2(swish(fc1(pooled)))) on padded (8,128)-aligned operands."""
    h = jnp.dot(p_ref[...], w1_ref[...], preferred_element_type=jnp.float32) + b1_ref[...]
    h = h * (1.0 / (1.0 + jnp.exp(-h)))                 # Swish
    s = jnp.dot(h, w2_ref[...], preferred_element_type=jnp.float32) + b2_ref[...]
    o_ref[...] = 1.0 / (1.0 + jnp.exp(-s))              # sigmoid


def _combine_kernel(skip_ref, res_ref, gate_ref, o_ref):
    """out = skip + residual * se_gate (gate broadcast per (n, c))."""
    o_ref[...] = (skip_ref[...] + res_ref[...] * gate_ref[...]).astype(o_ref.dtype)


# --------------------------- pallas wrappers -------------------------------- #

def _channel_stats(x2d):
    """Per-channel (sum, sum_of_squares) of an (M, C) slab in one streaming pass."""
    M, C = x2d.shape
    xd, rep = _lane_dense_view(x2d)
    R, L = xd.shape
    tm = _pick_rows(R, L * 4)
    s, q = pl.pallas_call(
        _stats_kernel,
        out_shape=(jax.ShapeDtypeStruct((1, L), jnp.float32),
                   jax.ShapeDtypeStruct((1, L), jnp.float32)),
        grid_spec=pltpu.PrefetchScalarGridSpec(
            num_scalar_prefetch=0,
            grid=(R // tm,),
            in_specs=[pl.BlockSpec((tm, L), lambda i: (i, 0))],
            out_specs=[pl.BlockSpec((1, L), lambda i: (0, 0)),
                       pl.BlockSpec((1, L), lambda i: (0, 0))],
        ),
        compiler_params=pltpu.CompilerParams(dimension_semantics=("arbitrary",)),
    )(xd)
    if rep > 1:
        s = s.reshape(rep, C).sum(axis=0)
        q = q.reshape(rep, C).sum(axis=0)
    else:
        s = s.reshape(C)
        q = q.reshape(C)
    return s, q


def _bn_swish(x2d, mean, var, gamma, beta, eps):
    """swish(batchnorm(x)) on an (M, C) channels-last slab (lane-dense blocks)."""
    M, C = x2d.shape
    scale = gamma / jnp.sqrt(var + eps)        # (C,)
    shift = beta - mean * scale                # (C,)
    xd, rep = _lane_dense_view(x2d)
    R, L = xd.shape
    scale_row = jnp.tile(scale, rep).reshape(1, L)
    shift_row = jnp.tile(shift, rep).reshape(1, L)
    tm = _pick_rows(R, L * 4 * 2)              # in + out bytes per row
    y = pl.pallas_call(
        _affine_swish_kernel,
        out_shape=jax.ShapeDtypeStruct((R, L), x2d.dtype),
        grid_spec=pltpu.PrefetchScalarGridSpec(
            num_scalar_prefetch=0,
            grid=(R // tm,),
            in_specs=[pl.BlockSpec((tm, L), lambda i: (i, 0)),
                      pl.BlockSpec((1, L), lambda i: (0, 0)),
                      pl.BlockSpec((1, L), lambda i: (0, 0))],
            out_specs=pl.BlockSpec((tm, L), lambda i: (i, 0)),
        ),
        compiler_params=pltpu.CompilerParams(dimension_semantics=("parallel",)),
    )(xd, scale_row, shift_row)
    return y.reshape(M, C)


def _matmul_bias(a, w, b):
    """(P, K) @ (K, Co) + b with row tiling; K and Co stay whole."""
    P, K = a.shape
    K2, Co = w.shape
    assert K == K2
    tp = _pick_rows(P, (K + Co) * 4 * 2)
    return pl.pallas_call(
        _matmul_bias_kernel,
        out_shape=jax.ShapeDtypeStruct((P, Co), jnp.float32),
        grid_spec=pltpu.PrefetchScalarGridSpec(
            num_scalar_prefetch=0,
            grid=(P // tp,),
            in_specs=[pl.BlockSpec((tp, K), lambda i: (i, 0)),
                      pl.BlockSpec((K, Co), lambda i: (0, 0)),
                      pl.BlockSpec((1, Co), lambda i: (0, 0))],
            out_specs=pl.BlockSpec((tp, Co), lambda i: (i, 0)),
        ),
        compiler_params=pltpu.CompilerParams(dimension_semantics=("parallel",)),
    )(a, w, b.reshape(1, Co))


def _im2col_3d(x_cl, stride):
    """3x3x3, pad=1 patches of a channels-last (N, D, H, W, C) tensor.

    Returns (patches, (N, Do, Ho, Wo)); patches is (N*Do*Ho*Wo, 27*C) with
    column order (kd, kh, kw, c), matching a DHWIO weight reshaped to (27*C, Co).
    """
    # TODO(synk): patch extraction is XLA slicing in the wrapper; a direct
    # in-kernel strided gather (manual DMA) would avoid materializing patches.
    N, D, H, W, C = x_cl.shape
    xp = jnp.pad(x_cl, ((0, 0), (1, 1), (1, 1), (1, 1), (0, 0)))
    Do = (D + 2 - 3) // stride + 1
    Ho = (H + 2 - 3) // stride + 1
    Wo = (W + 2 - 3) // stride + 1
    taps = []
    for kd in range(3):
        for kh in range(3):
            for kw in range(3):
                taps.append(xp[:, kd:kd + (Do - 1) * stride + 1:stride,
                                  kh:kh + (Ho - 1) * stride + 1:stride,
                                  kw:kw + (Wo - 1) * stride + 1:stride, :])
    patches = jnp.stack(taps, axis=-2)                  # (N, Do, Ho, Wo, 27, C)
    return patches.reshape(N * Do * Ho * Wo, 27 * C), (N, Do, Ho, Wo)


def _conv3d(x_cl, w_dhwio, bias, stride):
    kD, kH, kW, Cin, Cout = w_dhwio.shape
    patches, (N, Do, Ho, Wo) = _im2col_3d(x_cl, stride)
    w_mat = w_dhwio.reshape(kD * kH * kW * Cin, Cout)
    out = _matmul_bias(patches, w_mat, bias)
    return out.reshape(N, Do, Ho, Wo, Cout)


def _spatial_mean(res3d):
    """Mean over the spatial axis of a (N, Psp, C) slab -> (N, C)."""
    N, Psp, C = res3d.shape
    tile = _pick_rows(Psp, C * 4)
    pooled = pl.pallas_call(
        _make_pool_kernel(1.0 / Psp),
        out_shape=jax.ShapeDtypeStruct((N, 1, C), jnp.float32),
        grid_spec=pltpu.PrefetchScalarGridSpec(
            num_scalar_prefetch=0,
            grid=(N, Psp // tile),
            in_specs=[pl.BlockSpec((1, tile, C), lambda n, j: (n, j, 0))],
            out_specs=pl.BlockSpec((1, 1, C), lambda n, j: (n, 0, 0)),
        ),
        compiler_params=pltpu.CompilerParams(
            dimension_semantics=("parallel", "arbitrary")),
    )(res3d)
    return pooled.reshape(N, C)


def _se_gate(pooled, w1, b1, w2, b2):
    """Squeeze-excitation gate: sigmoid(fc2(swish(fc1(pooled)))), (N, C) -> (N, C)."""
    N, C = pooled.shape
    Cr = w1.shape[1]
    LP = 128                                   # pad lanes to native width
    RP = max(8, ((N + 7) // 8) * 8)            # pad rows to a sublane multiple
    p = jnp.zeros((RP, LP), jnp.float32).at[:N, :C].set(pooled)
    w1p = jnp.zeros((LP, LP), jnp.float32).at[:C, :Cr].set(w1)
    b1p = jnp.zeros((1, LP), jnp.float32).at[0, :Cr].set(b1)
    w2p = jnp.zeros((LP, LP), jnp.float32).at[:Cr, :C].set(w2)
    b2p = jnp.zeros((1, LP), jnp.float32).at[0, :C].set(b2)
    gate = pl.pallas_call(
        _se_mlp_kernel,
        out_shape=jax.ShapeDtypeStruct((RP, LP), jnp.float32),
        grid_spec=pltpu.PrefetchScalarGridSpec(
            num_scalar_prefetch=0,
            grid=(1,),
            in_specs=[pl.BlockSpec((RP, LP), lambda i: (0, 0)),
                      pl.BlockSpec((LP, LP), lambda i: (0, 0)),
                      pl.BlockSpec((1, LP), lambda i: (0, 0)),
                      pl.BlockSpec((LP, LP), lambda i: (0, 0)),
                      pl.BlockSpec((1, LP), lambda i: (0, 0))],
            out_specs=pl.BlockSpec((RP, LP), lambda i: (0, 0)),
        ),
    )(p, w1p, b1p, w2p, b2p)
    return gate[:N, :C]


def _combine(skip3d, res3d, gate):
    """out = skip + residual * gate, fused elementwise over (N, Psp, C)."""
    N, Psp, C = res3d.shape
    tile = _pick_rows(Psp, C * 4 * 3)
    return pl.pallas_call(
        _combine_kernel,
        out_shape=jax.ShapeDtypeStruct((N, Psp, C), jnp.float32),
        grid_spec=pltpu.PrefetchScalarGridSpec(
            num_scalar_prefetch=0,
            grid=(N, Psp // tile),
            in_specs=[pl.BlockSpec((1, tile, C), lambda n, j: (n, j, 0)),
                      pl.BlockSpec((1, tile, C), lambda n, j: (n, j, 0)),
                      pl.BlockSpec((1, 1, C), lambda n, j: (n, 0, 0))],
            out_specs=pl.BlockSpec((1, tile, C), lambda n, j: (n, j, 0)),
        ),
        compiler_params=pltpu.CompilerParams(
            dimension_semantics=("parallel", "parallel")),
    )(skip3d, res3d, gate.reshape(N, 1, C))


# -------------------------------- module ------------------------------------ #

class ResNetDownscaleBlock3d:
    """JAX/Pallas forward of the PyTorch ResNetDownscaleBlock3d (bottleneck=False).

    BatchNorm3d runs with batch statistics (training mode, matching a freshly
    constructed PyTorch module); activation is Swish (x * sigmoid(x)).
    Running-stat buffers are not tracked (they do not affect the forward output).
    """

    def __init__(self, in_channels, out_channels, mid_channels=None, scale=2,
                 bottleneck=False, eps=1e-5, key=None):
        assert scale > 1
        # TODO(synk): the bottleneck=True layer stack (non-default branch) is not implemented.
        assert not bottleneck, "only the default (bottleneck=False) branch is implemented"
        if mid_channels is None:
            mid_channels = out_channels
        self.cin, self.cmid, self.cout = in_channels, mid_channels, out_channels
        self.scale = int(scale)
        self.eps = float(eps)

        key = jax.random.PRNGKey(0) if key is None else key
        ks = jax.random.split(key, 16)

        def w_init(k, shape, fan_in):
            return jax.random.normal(k, shape, jnp.float32) / jnp.sqrt(jnp.float32(fan_in))

        cr = max(1, out_channels // 4)
        self.params = dict(
            # residual path
            bn1_gamma=1.0 + 0.1 * jax.random.normal(ks[0], (in_channels,), jnp.float32),
            bn1_beta=0.1 * jax.random.normal(ks[1], (in_channels,), jnp.float32),
            w1=w_init(ks[2], (3, 3, 3, in_channels, mid_channels), 27 * in_channels),
            b1=0.1 * jax.random.normal(ks[3], (mid_channels,), jnp.float32),
            bn2_gamma=1.0 + 0.1 * jax.random.normal(ks[4], (mid_channels,), jnp.float32),
            bn2_beta=0.1 * jax.random.normal(ks[5], (mid_channels,), jnp.float32),
            w2=w_init(ks[6], (3, 3, 3, mid_channels, out_channels), 27 * mid_channels),
            b2=0.1 * jax.random.normal(ks[7], (out_channels,), jnp.float32),
            # squeeze-excitation
            se_w1=w_init(ks[8], (out_channels, cr), out_channels),
            se_b1=0.1 * jax.random.normal(ks[9], (cr,), jnp.float32),
            se_w2=w_init(ks[10], (cr, out_channels), cr),
            se_b2=0.1 * jax.random.normal(ks[11], (out_channels,), jnp.float32),
            # skip path
            bns_gamma=1.0 + 0.1 * jax.random.normal(ks[12], (in_channels,), jnp.float32),
            bns_beta=0.1 * jax.random.normal(ks[13], (in_channels,), jnp.float32),
            ws=w_init(ks[14], (3, 3, 3, in_channels, out_channels), 27 * in_channels),
            bs=0.1 * jax.random.normal(ks[15], (out_channels,), jnp.float32),
        )

    def forward(self, x):
        """x: (N, Cin, D, H, W) float32 (PyTorch NCDHW). Returns (N, Cout, Do, Ho, Wo)."""
        p = self.params
        N, C, D, H, W = x.shape
        assert C == self.cin

        # Single layout conversion; every intermediate stays channels-last.
        x_cl = jnp.transpose(x, (0, 2, 3, 4, 1))               # (N, D, H, W, Cin)
        M0 = N * D * H * W
        x2d = x_cl.reshape(M0, C)

        # Fused single-pass batch statistics of x (shared by residual BN1 and skip BN).
        s0, q0 = _channel_stats(x2d)
        mean0 = s0 / M0
        var0 = q0 / M0 - mean0 * mean0                         # biased (training-mode BN)

        # ----------------------------- residual path -----------------------------
        h2d = _bn_swish(x2d, mean0, var0, p["bn1_gamma"], p["bn1_beta"], self.eps)
        h_cl = _conv3d(h2d.reshape(N, D, H, W, C), p["w1"], p["b1"], self.scale)
        _, Do, Ho, Wo, Cm = h_cl.shape
        M1 = N * Do * Ho * Wo
        h2d = h_cl.reshape(M1, Cm)

        s1, q1 = _channel_stats(h2d)
        mean1 = s1 / M1
        var1 = q1 / M1 - mean1 * mean1
        h2d = _bn_swish(h2d, mean1, var1, p["bn2_gamma"], p["bn2_beta"], self.eps)

        r_cl = _conv3d(h2d.reshape(N, Do, Ho, Wo, Cm), p["w2"], p["b2"], 1)
        res3d = r_cl.reshape(N, Do * Ho * Wo, self.cout)

        # squeeze-excitation gate
        pooled = _spatial_mean(res3d)                                   # (N, Cout)
        gate = _se_gate(pooled, p["se_w1"], p["se_b1"], p["se_w2"], p["se_b2"])

        # ------------------------------- skip path -------------------------------
        g2d = _bn_swish(x2d, mean0, var0, p["bns_gamma"], p["bns_beta"], self.eps)
        skip_cl = _conv3d(g2d.reshape(N, D, H, W, C), p["ws"], p["bs"], self.scale)
        skip3d = skip_cl.reshape(N, Do * Ho * Wo, self.cout)

        # ------------------------------- combine ----------------------------------
        out3d = _combine(skip3d, res3d, gate)                   # skip + res * gate
        out_cl = out3d.reshape(N, Do, Ho, Wo, self.cout)
        return jnp.transpose(out_cl, (0, 4, 1, 2, 3))           # back to NCDHW


# ------------------------------ pure-JAX reference --------------------------- #

def _reference_forward(x, params, scale, eps):
    hi = lax.Precision.HIGHEST

    def swish(v):
        return v * jax.nn.sigmoid(v)

    def bn(v, gamma, beta):
        mean = jnp.mean(v, axis=(0, 1, 2, 3))
        var = jnp.mean((v - mean) ** 2, axis=(0, 1, 2, 3))      # biased batch variance
        return (v - mean) / jnp.sqrt(var + eps) * gamma + beta

    def conv(v, w, b, s):
        out = lax.conv_general_dilated(
            v, w, window_strides=(s, s, s), padding=[(1, 1)] * 3,
            dimension_numbers=("NDHWC", "DHWIO", "NDHWC"), precision=hi)
        return out + b

    x_cl = jnp.transpose(x, (0, 2, 3, 4, 1))
    # residual path
    h = swish(bn(x_cl, params["bn1_gamma"], params["bn1_beta"]))
    h = conv(h, params["w1"], params["b1"], scale)
    h = swish(bn(h, params["bn2_gamma"], params["bn2_beta"]))
    h = conv(h, params["w2"], params["b2"], 1)
    pooled = jnp.mean(h, axis=(1, 2, 3))
    g = swish(jnp.dot(pooled, params["se_w1"], precision=hi) + params["se_b1"])
    gate = jax.nn.sigmoid(jnp.dot(g, params["se_w2"], precision=hi) + params["se_b2"])
    res = h * gate[:, None, None, None, :]
    # skip path
    k = swish(bn(x_cl, params["bns_gamma"], params["bns_beta"]))
    skip = conv(k, params["ws"], params["bs"], scale)
    out = skip + res
    return jnp.transpose(out, (0, 4, 1, 2, 3))


# ----------------------------------- main ------------------------------------ #

if __name__ == "__main__":
    key = jax.random.PRNGKey(0)
    kx, kp = jax.random.split(key)

    N, Cin, Cout = 2, 4, 8
    D = H = W = 16
    scale = 2

    x = jax.random.normal(kx, (N, Cin, D, H, W), jnp.float32)

    block = ResNetDownscaleBlock3d(Cin, Cout, scale=scale, key=kp)
    y = jax.block_until_ready(block.forward(x))

    y_ref = jax.block_until_ready(
        _reference_forward(x, block.params, block.scale, block.eps))

    assert y.shape == (N, Cout, D // scale, H // scale, W // scale), y.shape
    assert bool(jnp.all(jnp.isfinite(y)))
    max_err = float(jnp.max(jnp.abs(y - y_ref)))
    assert jnp.allclose(y, y_ref, atol=2e-3, rtol=2e-3), f"max abs err = {max_err}"

    print("KERNEL_OK")
</pallas_src>

<mosaic_0001>
module attributes {stable_mosaic.version = 11 : i64} {
  func.func @_stats_kernel(%arg0: i32, %arg1: memref<256x128xf32, #tpu.memory_space<vmem>>, %arg2: memref<1x128xf32, #tpu.memory_space<vmem>>, %arg3: memref<1x128xf32, #tpu.memory_space<vmem>>) attributes {dimension_semantics = [#tpu.dimension_semantics<arbitrary>], iteration_bounds = array<i64: 1>, scalar_prefetch = 0 : i64, scratch_operands = 0 : i64, tpu.core_type = #tpu.core_type<tc>, window_params = [{transform_indices = @transform_0, window_bounds = array<i64: 256, 128>}, {pipeline_mode = #tpu.pipeline_mode<synchronous>, transform_indices = @transform_1, window_bounds = array<i64: 1, 128>}, {pipeline_mode = #tpu.pipeline_mode<synchronous>, transform_indices = @transform_2, window_bounds = array<i64: 1, 128>}]} {
    %c0_i32 = arith.constant 0 : i32
    %0 = arith.cmpi eq, %arg0, %c0_i32 : i32
    %1 = arith.extui %0 : i1 to i32
    %c0_i32_0 = arith.constant 0 : i32
    %2 = arith.cmpi ne, %1, %c0_i32_0 : i32
    scf.if %2 {
      %cst_11 = arith.constant 0.000000e+00 : f32
      %15 = vector.broadcast %cst_11 : f32 to vector<1x128xf32>
      %c0_12 = arith.constant 0 : index
      %c0_13 = arith.constant 0 : index
      %16 = vector.load %arg2[%c0_12, %c0_13] : memref<1x128xf32, #tpu.memory_space<vmem>>, vector<1x128xf32>
      tpu.vector_store %arg2[%c0_12, %c0_13], %15 {strides = array<i32>} : memref<1x128xf32, #tpu.memory_space<vmem>>, vector<1x128xf32>,
      %cst_14 = arith.constant 0.000000e+00 : f32
      %17 = vector.broadcast %cst_14 : f32 to vector<1x128xf32>
      %c0_15 = arith.constant 0 : index
      %c0_16 = arith.constant 0 : index
      %18 = vector.load %arg3[%c0_15, %c0_16] : memref<1x128xf32, #tpu.memory_space<vmem>>, vector<1x128xf32>
      tpu.vector_store %arg3[%c0_15, %c0_16], %17 {strides = array<i32>} : memref<1x128xf32, #tpu.memory_space<vmem>>, vector<1x128xf32>,
    } else {
    }
    %c0 = arith.constant 0 : index
    %c0_1 = arith.constant 0 : index
    %3 = vector.load %arg1[%c0, %c0_1] : memref<256x128xf32, #tpu.memory_space<vmem>>, vector<256x128xf32>
    %c0_2 = arith.constant 0 : index
    %c0_3 = arith.constant 0 : index
    %4 = vector.load %arg2[%c0_2, %c0_3] : memref<1x128xf32, #tpu.memory_space<vmem>>, vector<1x128xf32>
    %cst = arith.constant dense<0.000000e+00> : vector<128xf32>
    %5 = vector.multi_reduction <add>, %3, %cst [0] : vector<256x128xf32> to vector<128xf32>
    %6 = vector.shape_cast %5 : vector<128xf32> to vector<1x128xf32>
    %7 = arith.addf %4, %6 : vector<1x128xf32>
    %c0_4 = arith.constant 0 : index
    %c0_5 = arith.constant 0 : index
    %8 = vector.load %arg2[%c0_4, %c0_5] : memref<1x128xf32, #tpu.memory_space<vmem>>, vector<1x128xf32>
    tpu.vector_store %arg2[%c0_4, %c0_5], %7 {strides = array<i32>} : memref<1x128xf32, #tpu.memory_space<vmem>>, vector<1x128xf32>,
    %c0_6 = arith.constant 0 : index
    %c0_7 = arith.constant 0 : index
    %9 = vector.load %arg3[%c0_6, %c0_7] : memref<1x128xf32, #tpu.memory_space<vmem>>, vector<1x128xf32>
    %10 = arith.mulf %3, %3 : vector<256x128xf32>
    %cst_8 = arith.constant dense<0.000000e+00> : vector<128xf32>
    %11 = vector.multi_reduction <add>, %10, %cst_8 [0] : vector<256x128xf32> to vector<128xf32>
    %12 = vector.shape_cast %11 : vector<128xf32> to vector<1x128xf32>
    %13 = arith.addf %9, %12 : vector<1x128xf32>
    %c0_9 = arith.constant 0 : index
    %c0_10 = arith.constant 0 : index
    %14 = vector.load %arg3[%c0_9, %c0_10] : memref<1x128xf32, #tpu.memory_space<vmem>>, vector<1x128xf32>
    tpu.vector_store %arg3[%c0_9, %c0_10], %13 {strides = array<i32>} : memref<1x128xf32, #tpu.memory_space<vmem>>, vector<1x128xf32>,
    return
  }
  func.func @transform_0(%arg0: i32) -> (i32, i32) {
    %c0_i32 = arith.constant 0 : i32
    %c0_i32_0 = arith.constant 0 : i32
    return %arg0, %c0_i32 : i32, i32
  }
  func.func @transform_1(%arg0: i32) -> (i32, i32) {
    %c0_i32 = arith.constant 0 : i32
    %c0_i32_0 = arith.constant 0 : i32
    %c0_i32_1 = arith.constant 0 : i32
    return %c0_i32, %c0_i32_0 : i32, i32
  }
  func.func @transform_2(%arg0: i32) -> (i32, i32) {
    %c0_i32 = arith.constant 0 : i32
    %c0_i32_0 = arith.constant 0 : i32
    %c0_i32_1 = arith.constant 0 : i32
    return %c0_i32, %c0_i32_0 : i32, i32
  }
}

</mosaic_0001>

<llo_original>
// kernel: tpu_custom_call.1
$region0: #{tpu_custom_call.1}
  #allocation0 [shape = 'u32[]', space=smem, size = 0x4, offset = 0x4, fixed_abs, tag = 'smem constant byte address 0x4 - core index']
  #allocation1 [shape = 'u32[72,128]{1,0:T(1,128)}', space=vmem, size = 0x9000, scoped, tag = 'internal scratch']
  %s0 = inlined_call_operand.hbm [shape: f32[256,128], index: 0, kind: input, shape index: {}]
  %s1 = inlined_call_operand.hbm [shape: f32[1,128], index: 1, kind: output, shape index: {0}]
  %s2 = inlined_call_operand.hbm [shape: f32[1,128], index: 2, kind: output, shape index: {1}]
  %3 = xla_tuple %s1, %s2
  %s4 = sld [smem:[#allocation0]]
  $region30: #{tpu_custom_call.1} parent=0
    _
  %s6 = ssub.s32 1, %s4
  %s7 = scalar_select 0, %s6, %s4
  $region1: #{tpu_custom_call.1} parent=0
    #allocation2 [shape = 'u8[131072]{0}', space=vmem, size = 0x20000, scoped, tag = 'input window, operand 0, single buffered']
    #allocation3 [shape = 's32[1]{0}', space=sflag, size = 0x4, scoped, tag = 'scoped memory for tpu_custom_call.1']
    #allocation4 [shape = 's32[1]{0}', space=sflag, size = 0x4, scoped, tag = 'scoped memory for tpu_custom_call.1']
    #allocation5 [shape = 'u8[512]{0}', space=vmem, size = 0x400, scoped, tag = 'output window, operand 0, single buffered']
    #allocation6 [shape = 'u8[512]{0}', space=vmem, size = 0x400, scoped, tag = 'output window, operand 1, single buffered']
    #allocation7 [shape = 's32[1]{0}', space=sflag, size = 0x4, scoped, tag = 'scoped memory for tpu_custom_call.1']
    %8 = vsyncpa [#allocation3], 0
    %9 = vsyncpa [#allocation4], 0
    %10 = vsyncpa [#allocation7], 0
    // Predicated region
    $region2: #{tpu_custom_call.1} parent=1 // pred_check
      _
    $region3: #{tpu_custom_call.1} parent=1 // pred_check_branch
      %12 = sbr.rel (0) target = $region5
    $region4: #{tpu_custom_call.1} parent=1 // pred_region
      %14 = vsyncadd [#allocation3], 0
      %s15 = sshll.u32 %s0, 4
      %s16 = int_to_ptr.hbm [resolvable:$true] %s15
      %s17 = sshll.u32 [#allocation2], 4
      %s18 = int_to_ptr.vmem [resolvable:$true] %s17
      %23 = dma.hbm_to_vmem [thread:$0]  %s16, 4096, %s18, [#allocation3], 128, 128, 8
    $region5: #{tpu_custom_call.1} parent=1 // pred_fallthru
      _
    // Predicated region
    $region6: #{tpu_custom_call.1} parent=1 // pred_check
      _
    $region7: #{tpu_custom_call.1} parent=1 // pred_check_branch
      %25 = sbr.rel (0) target = $region9
    $region8: #{tpu_custom_call.1} parent=1 // pred_region
      %27 = dma.done [#allocation3], 4096
    $region9: #{tpu_custom_call.1} parent=1 // pred_fallthru
      _
    %p28 = scmp.eq.s32.totalorder 0, 0
    // Predicated region
    $region10: #{tpu_custom_call.1} parent=1 // pred_check
      %p29 = pneg %p28
    $region11: #{tpu_custom_call.1} parent=1 // pred_check_branch
      %31 = sbr.rel (%p29) target = $region13
    $region12: #{tpu_custom_call.1} parent=1 // pred_region
      %32 = vst [vmem:[#allocation5] sm:$0x1] 0.0
      %33 = vst [vmem:[#allocation6] sm:$0x1] 0.0
    $region13: #{tpu_custom_call.1} parent=1 // pred_fallthru
      _
    %v34 = vld [vmem:[#allocation2] sm:$0xff]
    %v35 = vld [vmem:[#allocation2 + $0x8] sm:$0xff]
    %v36 = vld [vmem:[#allocation2 + $0x10] sm:$0xff]
    %v37 = vld [vmem:[#allocation2 + $0x18] sm:$0xff]
    %v38 = vld [vmem:[#allocation2 + $0x20] sm:$0xff]
    %v39 = vld [vmem:[#allocation2 + $0x28] sm:$0xff]
    %v40 = vld [vmem:[#allocation2 + $0x30] sm:$0xff]
    %v41 = vld [vmem:[#allocation2 + $0x38] sm:$0xff]
    %v42 = vld [vmem:[#allocation2 + $0x40] sm:$0xff]
    %v43 = vld [vmem:[#allocation2 + $0x48] sm:$0xff]
    %v44 = vld [vmem:[#allocation2 + $0x50] sm:$0xff]
    %v45 = vld [vmem:[#allocation2 + $0x58] sm:$0xff]
    %v46 = vld [vmem:[#allocation2 + $0x60] sm:$0xff]
    %v47 = vld [vmem:[#allocation2 + $0x68] sm:$0xff]
    %v48 = vld [vmem:[#allocation2 + $0x70] sm:$0xff]
    %v49 = vld [vmem:[#allocation2 + $0x78] sm:$0xff]
    %v50 = vld [vmem:[#allocation2 + $0x80] sm:$0xff]
    %v51 = vld [vmem:[#allocation2 + $0x88] sm:$0xff]
    %v52 = vld [vmem:[#allocation2 + $0x90] sm:$0xff]
    %v53 = vld [vmem:[#allocation2 + $0x98] sm:$0xff]
    %v54 = vld [vmem:[#allocation2 + $0xa0] sm:$0xff]
    %v55 = vld [vmem:[#allocation2 + $0xa8] sm:$0xff]
    %v56 = vld [vmem:[#allocation2 + $0xb0] sm:$0xff]
    %v57 = vld [vmem:[#allocation2 + $0xb8] sm:$0xff]
    %v58 = vld [vmem:[#allocation2 + $0xc0] sm:$0xff]
    %v59 = vld [vmem:[#allocation2 + $0xc8] sm:$0xff]
    %v60 = vld [vmem:[#allocation2 + $0xd0] sm:$0xff]
    %v61 = vld [vmem:[#allocation2 + $0xd8] sm:$0xff]
    %v62 = vld [vmem:[#allocation2 + $0xe0] sm:$0xff]
    %v63 = vld [vmem:[#allocation2 + $0xe8] sm:$0xff]
    %v64 = vld [vmem:[#allocation2 + $0xf0] sm:$0xff]
    %v65 = vld [vmem:[#allocation2 + $0xf8] sm:$0xff]
    %v66 = vld [vmem:[#allocation5] sm:$0x1]
    %v67 = vadd.f32 %v34, %v35
    %v68 = vadd.f32 %v67, %v36
    %v69 = vadd.f32 %v68, %v37
    %v70 = vadd.f32 %v69, %v38
    %v71 = vadd.f32 %v70, %v39
    %v72 = vadd.f32 %v71, %v40
    %v73 = vadd.f32 %v72, %v41
    %v74 = vadd.f32 %v73, %v42
    %v75 = vadd.f32 %v74, %v43
    %v76 = vadd.f32 %v75, %v44
    %v77 = vadd.f32 %v76, %v45
    %v78 = vadd.f32 %v77, %v46
    %v79 = vadd.f32 %v78, %v47
    %v80 = vadd.f32 %v79, %v48
    %v81 = vadd.f32 %v80, %v49
    %v82 = vadd.f32 %v81, %v50
    %v83 = vadd.f32 %v82, %v51
    %v84 = vadd.f32 %v83, %v52
    %v85 = vadd.f32 %v84, %v53
    %v86 = vadd.f32 %v85, %v54
    %v87 = vadd.f32 %v86, %v55
    %v88 = vadd.f32 %v87, %v56
    %v89 = vadd.f32 %v88, %v57
    %v90 = vadd.f32 %v89, %v58
    %v91 = vadd.f32 %v90, %v59
    %v92 = vadd.f32 %v91, %v60
    %v93 = vadd.f32 %v92, %v61
    %v94 = vadd.f32 %v93, %v62
    %v95 = vadd.f32 %v94, %v63
    %v96 = vadd.f32 %v95, %v64
    %v97 = vadd.f32 %v96, %v65
    %v98 = vrot.slane %v97, 4
    %v99 = vadd.f32 %v97, %v98
    %v100 = vrot.slane %v99, 2
    %v101 = vadd.f32 %v99, %v100
    %v102 = vrot.slane %v101, 1
    %v103 = vadd.f32 %v101, %v102
    %v104 = vadd.f32 %v66, %v103
    %105 = vst [vmem:[#allocation5] sm:$0x1] %v104
    %v106 = vld [vmem:[#allocation6] sm:$0x1]
    %v107 = vmul.f32 %v34, %v34
    %v108 = vmul.f32 %v35, %v35
    %v109 = vmul.f32 %v36, %v36
    %v110 = vmul.f32 %v37, %v37
    %v111 = vmul.f32 %v38, %v38
    %v112 = vmul.f32 %v39, %v39
    %v113 = vmul.f32 %v40, %v40
    %v114 = vmul.f32 %v41, %v41
    %v115 = vmul.f32 %v42, %v42
    %v116 = vmul.f32 %v43, %v43
    %v117 = vmul.f32 %v44, %v44
    %v118 = vmul.f32 %v45, %v45
    %v119 = vmul.f32 %v46, %v46
    %v120 = vmul.f32 %v47, %v47
    %v121 = vmul.f32 %v48, %v48
    %v122 = vmul.f32 %v49, %v49
    %v123 = vmul.f32 %v50, %v50
    %v124 = vmul.f32 %v51, %v51
    %v125 = vmul.f32 %v52, %v52
    %v126 = vmul.f32 %v53, %v53
    %v127 = vmul.f32 %v54, %v54
    %v128 = vmul.f32 %v55, %v55
    %v129 = vmul.f32 %v56, %v56
    %v130 = vmul.f32 %v57, %v57
    %v131 = vmul.f32 %v58, %v58
    %v132 = vmul.f32 %v59, %v59
    %v133 = vmul.f32 %v60, %v60
    %v134 = vmul.f32 %v61, %v61
    %v135 = vmul.f32 %v62, %v62
    %v136 = vmul.f32 %v63, %v63
    %v137 = vmul.f32 %v64, %v64
    %v138 = vmul.f32 %v65, %v65
    %v139 = vadd.f32 %v107, %v108
    %v140 = vadd.f32 %v139, %v109
    %v141 = vadd.f32 %v140, %v110
    %v142 = vadd.f32 %v141, %v111
    %v143 = vadd.f32 %v142, %v112
    %v144 = vadd.f32 %v143, %v113
    %v145 = vadd.f32 %v144, %v114
    %v146 = vadd.f32 %v145, %v115
    %v147 = vadd.f32 %v146, %v116
    %v148 = vadd.f32 %v147, %v117
    %v149 = vadd.f32 %v148, %v118
    %v150 = vadd.f32 %v149, %v119
    %v151 = vadd.f32 %v150, %v120
    %v152 = vadd.f32 %v151, %v121
    %v153 = vadd.f32 %v152, %v122
    %v154 = vadd.f32 %v153, %v123
    %v155 = vadd.f32 %v154, %v124
    %v156 = vadd.f32 %v155, %v125
    %v157 = vadd.f32 %v156, %v126
    %v158 = vadd.f32 %v157, %v127
    %v159 = vadd.f32 %v158, %v128
    %v160 = vadd.f32 %v159, %v129
    %v161 = vadd.f32 %v160, %v130
    %v162 = vadd.f32 %v161, %v131
    %v163 = vadd.f32 %v162, %v132
    %v164 = vadd.f32 %v163, %v133
    %v165 = vadd.f32 %v164, %v134
    %v166 = vadd.f32 %v165, %v135
    %v167 = vadd.f32 %v166, %v136
    %v168 = vadd.f32 %v167, %v137
    %v169 = vadd.f32 %v168, %v138
    %v170 = vrot.slane %v169, 4
    %v171 = vadd.f32 %v169, %v170
    %v172 = vrot.slane %v171, 2
    %v173 = vadd.f32 %v171, %v172
    %v174 = vrot.slane %v173, 1
    %v175 = vadd.f32 %v173, %v174
    %v176 = vadd.f32 %v106, %v175
    %177 = vst [vmem:[#allocation6] sm:$0x1] %v176
    // Predicated region
    $region14: #{tpu_custom_call.1} parent=1 // pred_check
      _
    $region15: #{tpu_custom_call.1} parent=1 // pred_check_branch
      %179 = sbr.rel (0) target = $region17
    $region16: #{tpu_custom_call.1} parent=1 // pred_region
      %181 = vsyncadd [#allocation4], 0
      %s183 = sshll.u32 [#allocation5], 4
      %s184 = int_to_ptr.vmem [resolvable:$true] %s183
      %s185 = sshll.u32 %s1, 4
      %s186 = int_to_ptr.hbm [resolvable:$true] %s185
      %188 = dma.vmem_to_hbm [thread:$0]  %s184, 16, %s186, [#allocation4]
    $region17: #{tpu_custom_call.1} parent=1 // pred_fallthru
      _
    // Predicated region
    $region18: #{tpu_custom_call.1} parent=1 // pred_check
      _
    $region19: #{tpu_custom_call.1} parent=1 // pred_check_branch
      %190 = sbr.rel (0) target = $region21
    $region20: #{tpu_custom_call.1} parent=1 // pred_region
      %192 = vsyncadd [#allocation7], 0
      %s194 = sshll.u32 [#allocation6], 4
      %s195 = int_to_ptr.vmem [resolvable:$true] %s194
      %s196 = sshll.u32 %s2, 4
      %s197 = int_to_ptr.hbm [resolvable:$true] %s196
      %199 = dma.vmem_to_hbm [thread:$0]  %s195, 16, %s197, [#allocation7]
    $region21: #{tpu_custom_call.1} parent=1 // pred_fallthru
      _
    // Predicated region
    $region22: #{tpu_custom_call.1} parent=1 // pred_check
      _
    $region23: #{tpu_custom_call.1} parent=1 // pred_check_branch
      %201 = sbr.rel (0) target = $region25
    $region24: #{tpu_custom_call.1} parent=1 // pred_region
      %203 = dma.done [#allocation4], 16
    $region25: #{tpu_custom_call.1} parent=1 // pred_fallthru
      _
    // Predicated region
    $region26: #{tpu_custom_call.1} parent=1 // pred_check
      _
    $region27: #{tpu_custom_call.1} parent=1 // pred_check_branch
      %205 = sbr.rel (0) target = $region29
    $region28: #{tpu_custom_call.1} parent=1 // pred_region
      %207 = dma.done [#allocation7], 16
    $region29: #{tpu_custom_call.1} parent=1 // pred_fallthru
      _
    %208 = vsyncpa [#allocation3], 1
    %209 = vsyncpa [#allocation4], 1
    %210 = vsyncpa [#allocation7], 1

</llo_original>
